<compile_context>
chip_gen: v7x
topology: tpu7x:2x2x1
jax: 0.10.0
libtpu: 0.0.40
codegen_flags: <defaults>
</compile_context>

<pallas_src>
import math

import numpy as np
import jax
import jax.numpy as jnp
from jax import lax
from jax.experimental import pallas as pl
from jax.experimental.pallas import tpu as pltpu  # noqa: F401  (grid-less call; kept for completeness)


# ----------------------------- Pallas kernel ------------------------------ #

def meso_kernel(x_ref, seg_ref, w_ref, out_ref):
    # x_ref  : [B*N, E]    node features, batches stacked along rows
    # seg_ref: [B*S, B*N]  block-diagonal subgraph membership (1.0 / 0.0),
    #                      assumed a disjoint one-hot partition per batch
    #                      (every node in exactly one non-empty subgraph).
    # w_ref  : [E, H]      shared projection weight
    # out_ref: [B*S, E]    coarsened features (wrapper reshapes to [B, S, E])
    x = x_ref[...]                                                   # [B*N, E]
    segb = seg_ref[...]                                              # [B*S, B*N]
    w = w_ref[...]                                                   # [E, H]

    # xw[b*N+n, h] = x[b,n,:] @ W                       -- tiny MXU dot
    xw = jnp.dot(x, w, preferred_element_type=jnp.float32)           # [B*N, H]

    # sw[b*S+s, h] = sum_{n in subgraph s} xw[b,n,h]    -- MXU dot vs. segB
    sw = jnp.dot(segb, xw, preferred_element_type=jnp.float32)       # [B*S, H]

    # scores[b*S+s, b*N+n] = xw[b,n,:] . sw[b,s,:]
    #   == sum_k fww[b,n,:] . fww[b,k,:]  whenever node n belongs to subgraph s
    # (contract over H on both operands; no explicit transpose op needed).
    scores = lax.dot_general(sw, xw,
                             dimension_numbers=(((1,), (1,)), ((), ())),
                             preferred_element_type=jnp.float32)     # [B*S, B*N]

    # Segmented softmax over each row's member columns.
    member = segb > 0.0
    masked = jnp.where(member, scores, jnp.float32(-1e30))           # [B*S, B*N]
    m = jnp.max(masked, axis=-1, keepdims=True)                      # [B*S, 1]
    ev = jnp.exp(masked - m)             # out-of-segment -> exp(~-1e30) == 0.0
    denom = jnp.sum(ev, axis=-1, keepdims=True)                      # [B*S, 1]
    att = ev / denom                                                 # [B*S, B*N]

    # out[b*S+s, e] = sum_{n in s} att[b,s,n] * x[b,n,e]  -- final MXU dot
    out_ref[...] = jnp.dot(att, x,
                           preferred_element_type=jnp.float32
                           ).astype(out_ref.dtype)                   # [B*S, E]


# ------------------------------- wrapper ----------------------------------- #

def sort_subgraph(subgraph_num):
    subgraph_16 = [5, 3, 3, 3, 3, 3, 5, 5, 5, 11, 3, 3, 3, 3, 3, 12]
    subgraph_7 = [5, 9, 9, 25, 9, 9, 12]
    if subgraph_num == 16:
        return subgraph_16
    if subgraph_num == 7:
        return subgraph_7
    return None


def _block_segment_matrix(graph_list, batch):
    """Constant block-diagonal one-hot membership matrix [B*S, B*N]."""
    S = len(graph_list)
    N = sum(graph_list)
    seg = np.zeros((S, N), dtype=np.float32)
    idx = 0
    for s, L in enumerate(graph_list):
        seg[s, idx:idx + L] = 1.0
        idx += L
    return np.kron(np.eye(batch, dtype=np.float32), seg)            # [B*S, B*N]


def meso_layer_forward(x, weight, graph_list):
    """x: [B, N, E] float32, weight: [E, H] float32 -> [B, S, E] float32."""
    B, N, E = x.shape
    S = len(graph_list)
    assert sum(graph_list) == N, "node count must match graph_list"
    assert all(L > 0 for L in graph_list), "empty subgraph not supported"

    segb = jnp.asarray(_block_segment_matrix(graph_list, B))         # [B*S, B*N]
    x2 = x.reshape(B * N, E)          # free major-dim merge (no transpose)

    # Single grid-less invocation: < 64 KB total, one fused op, no pipelining
    # or vmem tuning needed.  Output written as a flat [B*S, E] slab.
    out = pl.pallas_call(
        meso_kernel,
        out_shape=jax.ShapeDtypeStruct((B * S, E), jnp.float32),
    )(x2, segb, weight)

    return out.reshape(B, S, E)       # free major-dim split (matches torch.cat)


# ------------------------------ reference ---------------------------------- #

def meso_layer_ref(x, weight, graph_list):
    outs = []
    idx = 0
    for L in graph_list:
        sub = x[:, idx:idx + L, :]
        fww = jnp.einsum('bjg,gh->bjh', sub, weight)
        att_mat = jnp.einsum('bjh,bkh->bjk', fww, fww)
        att_vec = jax.nn.softmax(jnp.sum(att_mat, axis=2), axis=1)
        outs.append(jnp.einsum('bj,bjg->bg', att_vec, sub)[:, None, :])
        idx += L
    return jnp.concatenate(outs, axis=1)


# --------------------------------- main ------------------------------------ #

if __name__ == "__main__":
    subgraph_num = 16
    graph_list = sort_subgraph(subgraph_num)
    N = sum(graph_list)          # 73 nodes total
    B = 2                        # batch
    E = 5                        # emb_size (fixed in the module)
    H = 10                       # weight second dim (fixed in the module)

    key = jax.random.PRNGKey(0)
    kx, kw = jax.random.split(key, 2)

    # Deterministic parameter init mirroring reset_parameters():
    # stdv = 1/sqrt(len(trainable_vector)); trainable_vec itself is unused in
    # forward(), only its length feeds stdv.  Use trainable_vector of length N.
    stdv = 1.0 / math.sqrt(float(N))
    weight = jax.random.uniform(kw, (E, H), dtype=jnp.float32,
                                minval=-stdv, maxval=stdv)

    # Input features (post graphpool.feature_trans layout): [B, N, E]
    x = jax.random.normal(kx, (B, N, E), dtype=jnp.float32)

    out = meso_layer_forward(x, weight, graph_list)
    out = jax.block_until_ready(out)

    ref = jax.block_until_ready(meso_layer_ref(x, weight, graph_list))
    assert out.shape == (B, subgraph_num, E), out.shape
    assert jnp.allclose(out, ref, atol=1e-4, rtol=1e-4), \
        float(jnp.max(jnp.abs(out - ref)))

    print("KERNEL_OK")
</pallas_src>

<mosaic_0001>
module attributes {stable_mosaic.version = 11 : i64} {
  func.func @meso_kernel(%arg0: memref<146x5xf32, #tpu.memory_space<vmem>>, %arg1: memref<32x146xf32, #tpu.memory_space<vmem>>, %arg2: memref<5x10xf32, #tpu.memory_space<vmem>>, %arg3: memref<32x5xf32, #tpu.memory_space<vmem>>) attributes {dimension_semantics = [], scalar_prefetch = 0 : i64, scratch_operands = 0 : i64, tpu.core_type = #tpu.core_type<tc>} {
    %c0 = arith.constant 0 : index
    %c0_0 = arith.constant 0 : index
    %0 = vector.load %arg0[%c0, %c0_0] : memref<146x5xf32, #tpu.memory_space<vmem>>, vector<146x5xf32>
    %c0_1 = arith.constant 0 : index
    %c0_2 = arith.constant 0 : index
    %1 = vector.load %arg1[%c0_1, %c0_2] : memref<32x146xf32, #tpu.memory_space<vmem>>, vector<32x146xf32>
    %c0_3 = arith.constant 0 : index
    %c0_4 = arith.constant 0 : index
    %2 = vector.load %arg2[%c0_3, %c0_4] : memref<5x10xf32, #tpu.memory_space<vmem>>, vector<5x10xf32>
    %cst = arith.constant dense<0.000000e+00> : vector<146x10xf32>
    %3 = tpu.matmul %0, %2, %cst {dimension_numbers = #tpu.dot_dimension_numbers<[1], [0], [0], [1], [0, 0, 1, 1], [], []>} : vector<146x5xf32>, vector<5x10xf32>, vector<146x10xf32> -> vector<146x10xf32>
    %cst_5 = arith.constant dense<0.000000e+00> : vector<32x10xf32>
    %4 = tpu.matmul %1, %3, %cst_5 {dimension_numbers = #tpu.dot_dimension_numbers<[1], [0], [0], [1], [0, 0, 1, 1], [], []>} : vector<32x146xf32>, vector<146x10xf32>, vector<32x10xf32> -> vector<32x10xf32>
    %cst_6 = arith.constant dense<0.000000e+00> : vector<32x146xf32>
    %5 = tpu.matmul %4, %3, %cst_6 {dimension_numbers = #tpu.dot_dimension_numbers<[1], [1], [0], [0], [0, 0, 1, 0], [], []>} : vector<32x10xf32>, vector<146x10xf32>, vector<32x146xf32> -> vector<32x146xf32>
    %cst_7 = arith.constant 0.000000e+00 : f32
    %6 = vector.broadcast %cst_7 : f32 to vector<32x146xf32>
    %7 = arith.cmpf ogt, %1, %6 : vector<32x146xf32>
    %cst_8 = arith.constant -1.000000e+30 : f32
    %8 = vector.broadcast %cst_8 : f32 to vector<32x146xf32>
    %9 = arith.select %7, %5, %8 : vector<32x146xi1>, vector<32x146xf32>
    %cst_9 = arith.constant dense<0xFF800000> : vector<32xf32>
    %10 = vector.multi_reduction <maximumf>, %9, %cst_9 [1] : vector<32x146xf32> to vector<32xf32>
    %11 = vector.shape_cast %10 : vector<32xf32> to vector<32x1xf32>
    %12 = vector.broadcast %11 : vector<32x1xf32> to vector<32x146xf32>
    %13 = arith.subf %9, %12 : vector<32x146xf32>
    %14 = math.exp %13 : vector<32x146xf32>
    %cst_10 = arith.constant dense<0.000000e+00> : vector<32xf32>
    %15 = vector.multi_reduction <add>, %14, %cst_10 [1] : vector<32x146xf32> to vector<32xf32>
    %16 = vector.shape_cast %15 : vector<32xf32> to vector<32x1xf32>
    %17 = vector.broadcast %16 : vector<32x1xf32> to vector<32x146xf32>
    %18 = arith.divf %14, %17 : vector<32x146xf32>
    %cst_11 = arith.constant dense<0.000000e+00> : vector<32x5xf32>
    %19 = tpu.matmul %18, %0, %cst_11 {dimension_numbers = #tpu.dot_dimension_numbers<[1], [0], [0], [1], [0, 0, 1, 1], [], []>} : vector<32x146xf32>, vector<146x5xf32>, vector<32x5xf32> -> vector<32x5xf32>
    %c0_12 = arith.constant 0 : index
    %c0_13 = arith.constant 0 : index
    %20 = vector.load %arg3[%c0_12, %c0_13] : memref<32x5xf32, #tpu.memory_space<vmem>>, vector<32x5xf32>
    tpu.vector_store %arg3[%c0_12, %c0_13], %19 {strides = array<i32>} : memref<32x5xf32, #tpu.memory_space<vmem>>, vector<32x5xf32>,
    return
  }
}

</mosaic_0001>

<llo_original>
// kernel: tpu_custom_call.1
$region0: #{tpu_custom_call.1}
  #allocation0 [shape = 'u32[]', space=smem, size = 0x4, offset = 0x4, fixed_abs, tag = 'smem constant byte address 0x4 - core index']
  #allocation1 [shape = 'u32[144,128]{1,0:T(1,128)}', space=vmem, size = 0x12000, scoped, tag = 'internal scratch']
  %s0 = inlined_call_operand.vmem [shape: f32[146,5], index: 0, kind: input, shape index: {}]
  %s1 = inlined_call_operand.vmem [shape: f32[32,146], index: 1, kind: input, shape index: {}]
  %s2 = inlined_call_operand.vmem [shape: f32[5,10], index: 2, kind: input, shape index: {}]
  %s3 = inlined_call_operand.vmem [shape: f32[32,5], index: 3, kind: output, shape index: {}]
  %s4 = sld [smem:[#allocation0]]
  $region22: #{tpu_custom_call.1} parent=0
    _
  %s6 = ssub.s32 1, %s4
  %s7 = scalar_select 0, %s6, %s4
  // Predicated region
  $region2: #{tpu_custom_call.1} parent=0 // pred_check
    _
  $region3: #{tpu_custom_call.1} parent=0 // pred_check_branch
    %9 = sbr.rel (0) target = $region5
  $region4: #{tpu_custom_call.1} parent=0 // pred_region
    _
  $region5: #{tpu_custom_call.1} parent=0 // pred_fallthru
    _
  // Predicated region
  $region6: #{tpu_custom_call.1} parent=0 // pred_check
    _
  $region7: #{tpu_custom_call.1} parent=0 // pred_check_branch
    %11 = sbr.rel (0) target = $region9
  $region8: #{tpu_custom_call.1} parent=0 // pred_region
    _
  $region9: #{tpu_custom_call.1} parent=0 // pred_fallthru
    _
  // Predicated region
  $region10: #{tpu_custom_call.1} parent=0 // pred_check
    _
  $region11: #{tpu_custom_call.1} parent=0 // pred_check_branch
    %13 = sbr.rel (0) target = $region13
  $region12: #{tpu_custom_call.1} parent=0 // pred_region
    _
  $region13: #{tpu_custom_call.1} parent=0 // pred_fallthru
    _
  %v14 = vld [vmem:[%s0] sm:$0xff]
  %v15 = vld [vmem:[%s0 + $0x8] sm:$0xff]
  %v16 = vld [vmem:[%s0 + $0x10] sm:$0xff]
  %v17 = vld [vmem:[%s0 + $0x18] sm:$0xff]
  %v18 = vld [vmem:[%s0 + $0x20] sm:$0xff]
  %v19 = vld [vmem:[%s0 + $0x28] sm:$0xff]
  %v20 = vld [vmem:[%s0 + $0x30] sm:$0xff]
  %v21 = vld [vmem:[%s0 + $0x38] sm:$0xff]
  %v22 = vld [vmem:[%s0 + $0x40] sm:$0xff]
  %v23 = vld [vmem:[%s0 + $0x48] sm:$0xff]
  %v24 = vld [vmem:[%s0 + $0x50] sm:$0xff]
  %v25 = vld [vmem:[%s0 + $0x58] sm:$0xff]
  %v26 = vld [vmem:[%s0 + $0x60] sm:$0xff]
  %v27 = vld [vmem:[%s0 + $0x68] sm:$0xff]
  %v28 = vld [vmem:[%s0 + $0x70] sm:$0xff]
  %v29 = vld [vmem:[%s0 + $0x78] sm:$0xff]
  %v30 = vld [vmem:[%s0 + $0x80] sm:$0xff]
  %v31 = vld [vmem:[%s0 + $0x88] sm:$0xff]
  %v32 = vld [vmem:[%s0 + $0x90] sm:$0x3]
  %v33 = vld [vmem:[%s1] sm:$0xff]
  %v34 = vld [vmem:[%s1 + $0x8] sm:$0xff]
  %v35 = vld [vmem:[%s1 + $0x10] sm:$0xff]
  %v36 = vld [vmem:[%s1 + $0x18] sm:$0xff]
  %v37 = vld [vmem:[%s1 + $0x20] sm:$0xff]
  %v38 = vld [vmem:[%s1 + $0x28] sm:$0xff]
  %v39 = vld [vmem:[%s1 + $0x30] sm:$0xff]
  %v40 = vld [vmem:[%s1 + $0x38] sm:$0xff]
  %v41 = vld [vmem:[%s2] sm:$0x1f]
  %vm42 = vcmask 39936
  %v44 = vsel %vm42, %v14, 0
  %v47 = vsel %vm42, %v15, 0
  %v50 = vsel %vm42, %v16, 0
  %v53 = vsel %vm42, %v17, 0
  %v56 = vsel %vm42, %v18, 0
  %v59 = vsel %vm42, %v19, 0
  %v62 = vsel %vm42, %v20, 0
  %v65 = vsel %vm42, %v21, 0
  %v68 = vsel %vm42, %v22, 0
  %v71 = vsel %vm42, %v23, 0
  %v74 = vsel %vm42, %v24, 0
  %v77 = vsel %vm42, %v25, 0
  %v80 = vsel %vm42, %v26, 0
  %v83 = vsel %vm42, %v27, 0
  %v86 = vsel %vm42, %v28, 0
  %v89 = vsel %vm42, %v29, 0
  %v92 = vsel %vm42, %v30, 0
  %v95 = vsel %vm42, %v31, 0
  %v98 = vsel %vm42, %v32, 0
  %vm100 = vcmask 1044480
  %v102 = vsel %vm100, %v41, 0
  %104 = vmatprep.subr.mxu0 0.0
  %105 = vmatpush1.msra.mxu0 %v102
  %106 = vmatprep.subr.mxu0 0.0
  %107 = vmatpush1.msra.mxu0 0.0
  %108 = vmatprep.subr.mxu0 0.0
  %109 = vmatpush1.msra.mxu0 0.0
  %110 = vmatprep.subr.mxu0 0.0
  %111 = vmatpush1.msra.mxu0 0.0
  %112 = vmatprep.subr.mxu0 0.0
  %113 = vmatpush1.msra.mxu0 0.0
  %114 = vmatprep.subr.mxu0 0.0
  %115 = vmatpush1.msra.mxu0 0.0
  %116 = vmatprep.subr.mxu0 0.0
  %117 = vmatpush1.msra.mxu0 0.0
  %118 = vmatprep.subr.mxu0 0.0
  %119 = vmatpush1.msra.mxu0 0.0
  %120 = vmatprep.subr.mxu0 0.0
  %121 = vmatpush1.msra.mxu0 0.0
  %122 = vmatprep.subr.mxu0 0.0
  %123 = vmatpush1.msra.mxu0 0.0
  %124 = vmatprep.subr.mxu0 0.0
  %125 = vmatpush1.msra.mxu0 0.0
  %126 = vmatprep.subr.mxu0 0.0
  %127 = vmatpush1.msra.mxu0 0.0
  %128 = vmatprep.subr.mxu0 0.0
  %129 = vmatpush1.msra.mxu0 0.0
  %130 = vmatprep.subr.mxu0 0.0
  %131 = vmatpush1.msra.mxu0 0.0
  %132 = vmatprep.subr.mxu0 0.0
  %133 = vmatpush1.msra.mxu0 0.0
  %134 = vmatprep.subr.mxu0 0.0
  %135 = vmatpush1.msra.mxu0 0.0
  %136 = vmatprep.subr.mxu0 0.0
  %137 = vmatpush1.msra.mxu0 0.0
  %138 = vmatprep.subr.mxu0 0.0
  %139 = vmatpush1.msra.mxu0 0.0
  %140 = vmatprep.subr.mxu0 0.0
  %141 = vmatpush1.msra.mxu0 0.0
  %142 = vmatprep.subr.mxu0 0.0
  %143 = vmatpush1.msra.mxu0 0.0
  %144 = vmatprep.subr.mxu0 0.0
  %145 = vmatpush1.msra.mxu0 0.0
  %146 = vmatprep.subr.mxu0 0.0
  %147 = vmatpush1.msra.mxu0 0.0
  %148 = vmatprep.subr.mxu0 0.0
  %149 = vmatpush1.msra.mxu0 0.0
  %150 = vmatprep.subr.mxu0 0.0
  %151 = vmatpush1.msra.mxu0 0.0
  %152 = vmatprep.subr.mxu0 0.0
  %153 = vmatpush1.msra.mxu0 0.0
  %154 = vmatprep.subr.mxu0 0.0
  %155 = vmatpush1.msra.mxu0 0.0
  %156 = vmatprep.subr.mxu0 0.0
  %157 = vmatpush1.msra.mxu0 0.0
  %158 = vmatprep.subr.mxu0 0.0
  %159 = vmatpush1.msra.mxu0 0.0
  %160 = vmatprep.subr.mxu0 0.0
  %161 = vmatpush1.msra.mxu0 0.0
  %162 = vmatprep.subr.mxu0 0.0
  %163 = vmatpush1.msra.mxu0 0.0
  %164 = vmatprep.subr.mxu0 0.0
  %165 = vmatpush1.msra.mxu0 0.0
  %166 = vmatprep.subr.mxu0 0.0
  %167 = vmatpush1.msra.mxu0 0.0
  %168 = vmatprep.mubr.f32.mxu0 0.0
  %169 = vmatmul.mubr.f32.gmra.mrb[0].mxu0 %v44
  %v170 = vpop.f32.mrb[0].mxu0
  %v171 = vadd.f32 0.0, %v170
  %v172 = vpop.f32.mrb[0].mxu0
  %173 = vmatprep.mubr.f32.mxu0 0.0
  %174 = vmatmul.mubr.f32.gmra.mrb[0].mxu0 %v47
  %v175 = vpop.f32.mrb[0].mxu0
  %v176 = vadd.f32 0.0, %v175
  %v177 = vpop.f32.mrb[0].mxu0
  %178 = vmatprep.mubr.f32.mxu0 0.0
  %179 = vmatmul.mubr.f32.gmra.mrb[0].mxu0 %v50
  %v180 = vpop.f32.mrb[0].mxu0
  %v181 = vadd.f32 0.0, %v180
  %v182 = vpop.f32.mrb[0].mxu0
  %183 = vmatprep.mubr.f32.mxu0 0.0
  %184 = vmatmul.mubr.f32.gmra.mrb[0].mxu0 %v53
  %v185 = vpop.f32.mrb[0].mxu0
  %v186 = vadd.f32 0.0, %v185
  %v187 = vpop.f32.mrb[0].mxu0
  %188 = vmatprep.mubr.f32.mxu0 0.0
  %189 = vmatmul.mubr.f32.gmra.mrb[0].mxu0 %v56
  %v190 = vpop.f32.mrb[0].mxu0
  %v191 = vadd.f32 0.0, %v190
  %v192 = vpop.f32.mrb[0].mxu0
  %193 = vmatprep.mubr.f32.mxu0 0.0
  %194 = vmatmul.mubr.f32.gmra.mrb[0].mxu0 %v59
  %v195 = vpop.f32.mrb[0].mxu0
  %v196 = vadd.f32 0.0, %v195
  %v197 = vpop.f32.mrb[0].mxu0
  %198 = vmatprep.mubr.f32.mxu0 0.0
  %199 = vmatmul.mubr.f32.gmra.mrb[0].mxu0 %v62
  %v200 = vpop.f32.mrb[0].mxu0
  %v201 = vadd.f32 0.0, %v200
  %v202 = vpop.f32.mrb[0].mxu0
  %203 = vmatprep.mubr.f32.mxu0 0.0
  %204 = vmatmul.mubr.f32.gmra.mrb[0].mxu0 %v65
  %v205 = vpop.f32.mrb[0].mxu0
  %v206 = vadd.f32 0.0, %v205
  %v207 = vpop.f32.mrb[0].mxu0
  %208 = vmatprep.mubr.f32.mxu0 0.0
  %209 = vmatmul.mubr.f32.gmra.mrb[0].mxu0 %v68
  %v210 = vpop.f32.mrb[0].mxu0
  %v211 = vadd.f32 0.0, %v210
  %v212 = vpop.f32.mrb[0].mxu0
  %213 = vmatprep.mubr.f32.mxu0 0.0
  %214 = vmatmul.mubr.f32.gmra.mrb[0].mxu0 %v71
  %v215 = vpop.f32.mrb[0].mxu0
  %v216 = vadd.f32 0.0, %v215
  %v217 = vpop.f32.mrb[0].mxu0
  %218 = vmatprep.mubr.f32.mxu0 0.0
  %219 = vmatmul.mubr.f32.gmra.mrb[0].mxu0 %v74
  %v220 = vpop.f32.mrb[0].mxu0
  %v221 = vadd.f32 0.0, %v220
  %v222 = vpop.f32.mrb[0].mxu0
  %223 = vmatprep.mubr.f32.mxu0 0.0
  %224 = vmatmul.mubr.f32.gmra.mrb[0].mxu0 %v77
  %v225 = vpop.f32.mrb[0].mxu0
  %v226 = vadd.f32 0.0, %v225
  %v227 = vpop.f32.mrb[0].mxu0
  %228 = vmatprep.mubr.f32.mxu0 0.0
  %229 = vmatmul.mubr.f32.gmra.mrb[0].mxu0 %v80
  %v230 = vpop.f32.mrb[0].mxu0
  %v231 = vadd.f32 0.0, %v230
  %v232 = vpop.f32.mrb[0].mxu0
  %233 = vmatprep.mubr.f32.mxu0 0.0
  %234 = vmatmul.mubr.f32.gmra.mrb[0].mxu0 %v83
  %v235 = vpop.f32.mrb[0].mxu0
  %v236 = vadd.f32 0.0, %v235
  %v237 = vpop.f32.mrb[0].mxu0
  %238 = vmatprep.mubr.f32.mxu0 0.0
  %239 = vmatmul.mubr.f32.gmra.mrb[0].mxu0 %v86
  %v240 = vpop.f32.mrb[0].mxu0
  %v241 = vadd.f32 0.0, %v240
  %v242 = vpop.f32.mrb[0].mxu0
  %243 = vmatprep.mubr.f32.mxu0 0.0
  %244 = vmatmul.mubr.f32.gmra.mrb[0].mxu0 %v89
  %v245 = vpop.f32.mrb[0].mxu0
  %v246 = vadd.f32 0.0, %v245
  %v247 = vpop.f32.mrb[0].mxu0
  %248 = vmatprep.mubr.f32.mxu0 0.0
  %249 = vmatmul.mubr.f32.gmra.mrb[0].mxu0 %v92
  %v250 = vpop.f32.mrb[0].mxu0
  %v251 = vadd.f32 0.0, %v250
  %v252 = vpop.f32.mrb[0].mxu0
  %253 = vmatprep.mubr.f32.mxu0 0.0
  %254 = vmatmul.mubr.f32.gmra.mrb[0].mxu0 %v95
  %v255 = vpop.f32.mrb[0].mxu0
  %v256 = vadd.f32 0.0, %v255
  %v257 = vpop.f32.mrb[0].mxu0
  %258 = vmatprep.mubr.f32.mxu0 0.0
  %259 = vmatmul.mubr.f32.gmra.mrb[0].mxu0 %v98
  %v260 = vpop.f32.mrb[0].mxu0
  %v261 = vadd.f32 0.0, %v260
  %v262 = vpop.f32.mrb[0].mxu0
  %263 = vdwg.mxu0
  %vm264 = vcmask 146432
  %v266 = vsel %vm264, %v34, 0
  %v269 = vsel %vm264, %v36, 0
  %v272 = vsel %vm264, %v38, 0
  %v275 = vsel %vm264, %v40, 0
  %vm277 = vcmask 1041408
  %v279 = vsel %vm277, %v261, 0
  %281 = vmatprep.subr.mxu0 0.0
  %282 = vmatpush1.msra.mxu0 %v171
  %283 = vmatprep.subr.mxu0 0.0
  %284 = vmatpush1.msra.mxu0 %v176
  %285 = vmatprep.subr.mxu0 0.0
  %286 = vmatpush1.msra.mxu0 %v181
  %287 = vmatprep.subr.mxu0 0.0
  %288 = vmatpush1.msra.mxu0 %v186
  %289 = vmatprep.subr.mxu0 0.0
  %290 = vmatpush1.msra.mxu0 %v191
  %291 = vmatprep.subr.mxu0 0.0
  %292 = vmatpush1.msra.mxu0 %v196
  %293 = vmatprep.subr.mxu0 0.0
  %294 = vmatpush1.msra.mxu0 %v201
  %295 = vmatprep.subr.mxu0 0.0
  %296 = vmatpush1.msra.mxu0 %v206
  %297 = vmatprep.subr.mxu0 0.0
  %298 = vmatpush1.msra.mxu0 %v211
  %299 = vmatprep.subr.mxu0 0.0
  %300 = vmatpush1.msra.mxu0 %v216
  %301 = vmatprep.subr.mxu0 0.0
  %302 = vmatpush1.msra.mxu0 %v221
  %303 = vmatprep.subr.mxu0 0.0
  %304 = vmatpush1.msra.mxu0 %v226
  %305 = vmatprep.subr.mxu0 0.0
  %306 = vmatpush1.msra.mxu0 %v231
  %307 = vmatprep.subr.mxu0 0.0
  %308 = vmatpush1.msra.mxu0 %v236
  %309 = vmatprep.subr.mxu0 0.0
  %310 = vmatpush1.msra.mxu0 %v241
  %311 = vmatprep.subr.mxu0 0.0
  %312 = vmatpush1.msra.mxu0 %v246
  %313 = vmatprep.subr.mxu0 0.0
  %314 = vmatpush1.msra.mxu0 %v251
  %315 = vmatprep.subr.mxu0 0.0
  %316 = vmatpush1.msra.mxu0 %v256
  %317 = vmatprep.subr.mxu0 0.0
  %318 = vmatpush1.msra.mxu0 %v279
  %319 = vmatprep.subr.mxu0 0.0
  %320 = vmatpush1.msra.mxu0 0.0
  %321 = vmatprep.subr.mxu0 0.0
  %322 = vmatpush1.msra.mxu0 0.0
  %323 = vmatprep.subr.mxu0 0.0
  %324 = vmatpush1.msra.mxu0 0.0
  %325 = vmatprep.subr.mxu0 0.0
  %326 = vmatpush1.msra.mxu0 0.0
  %327 = vmatprep.subr.mxu0 0.0
  %328 = vmatpush1.msra.mxu0 0.0
  %329 = vmatprep.subr.mxu0 0.0
  %330 = vmatpush1.msra.mxu0 0.0
  %331 = vmatprep.subr.mxu0 0.0
  %332 = vmatpush1.msra.mxu0 0.0
  %333 = vmatprep.subr.mxu0 0.0
  %334 = vmatpush1.msra.mxu0 0.0
  %335 = vmatprep.subr.mxu0 0.0
  %336 = vmatpush1.msra.mxu0 0.0
  %337 = vmatprep.subr.mxu0 0.0
  %338 = vmatpush1.msra.mxu0 0.0
  %339 = vmatprep.subr.mxu0 0.0
  %340 = vmatpush1.msra.mxu0 0.0
  %341 = vmatprep.subr.mxu0 0.0
  %342 = vmatpush1.msra.mxu0 0.0
  %343 = vmatprep.subr.mxu0 0.0
  %344 = vmatpush1.msra.mxu0 0.0
  %345 = vmatprep.mubr.f32.mxu0 %v266
  %346 = vmatmul.mubr.f32.gmra.mrb[0].mxu0 %v33
  %v347 = vpop.f32.mrb[0].mxu0
  %v348 = vadd.f32 0.0, %v347
  %v349 = vpop.f32.mrb[0].mxu0
  %350 = vmatprep.mubr.f32.mxu0 %v269
  %351 = vmatmul.mubr.f32.gmra.mrb[0].mxu0 %v35
  %v352 = vpop.f32.mrb[0].mxu0
  %v353 = vadd.f32 0.0, %v352
  %v354 = vpop.f32.mrb[0].mxu0
  %355 = vmatprep.mubr.f32.mxu0 %v272
  %356 = vmatmul.mubr.f32.gmra.mrb[0].mxu0 %v37
  %v357 = vpop.f32.mrb[0].mxu0
  %v358 = vadd.f32 0.0, %v357
  %v359 = vpop.f32.mrb[0].mxu0
  %360 = vmatprep.mubr.f32.mxu0 %v275
  %361 = vmatmul.mubr.f32.gmra.mrb[0].mxu0 %v39
  %v362 = vpop.f32.mrb[0].mxu0
  %v363 = vadd.f32 0.0, %v362
  %v364 = vpop.f32.mrb[0].mxu0
  %365 = vdwg.mxu0
  %vm366 = vcmask 80896
  %v368 = vsel %vm366, %v348, 0
  %v371 = vsel %vm366, %v353, 0
  %v374 = vsel %vm366, %v358, 0
  %v377 = vsel %vm366, %v363, 0
  %v380 = vsel %vm366, %v171, 0
  %v383 = vsel %vm366, %v176, 0
  %v386 = vsel %vm366, %v181, 0
  %v389 = vsel %vm366, %v186, 0
  %v392 = vsel %vm366, %v191, 0
  %v395 = vsel %vm366, %v196, 0
  %v398 = vsel %vm366, %v201, 0
  %v401 = vsel %vm366, %v206, 0
  %v404 = vsel %vm366, %v211, 0
  %v407 = vsel %vm366, %v216, 0
  %v410 = vsel %vm366, %v221, 0
  %v413 = vsel %vm366, %v226, 0
  %v416 = vsel %vm366, %v231, 0
  %v419 = vsel %vm366, %v236, 0
  %v422 = vsel %vm366, %v241, 0
  %v425 = vsel %vm366, %v246, 0
  %v428 = vsel %vm366, %v251, 0
  %v431 = vsel %vm366, %v256, 0
  %v433 = vsel %vm366, %v261, 0
  %435 = vmatprep.subr.mxu0 0.0
  %436 = vmatpush1.xpose.msra.mxu0 %v380
  %437 = vmatprep.subr.mxu0 0.0
  %438 = vmatpush1.xpose.msra.mxu0 %v383
  %439 = vmatprep.subr.mxu0 0.0
  %440 = vmatpush1.xpose.msra.mxu0 %v386
  %441 = vmatprep.subr.mxu0 0.0
  %442 = vmatpush1.xpose.msra.mxu0 %v389
  %443 = vmatprep.subr.mxu0 0.0
  %444 = vmatpush1.xpose.msra.mxu0 %v392
  %445 = vmatprep.subr.mxu0 0.0
  %446 = vmatpush1.xpose.msra.mxu0 %v395
  %447 = vmatprep.subr.mxu0 0.0
  %448 = vmatpush1.xpose.msra.mxu0 %v398
  %449 = vmatprep.subr.mxu0 0.0
  %450 = vmatpush1.xpose.msra.mxu0 %v401
  %451 = vmatprep.subr.mxu0 0.0
  %452 = vmatpush1.xpose.msra.mxu0 %v404
  %453 = vmatprep.subr.mxu0 0.0
  %454 = vmatpush1.xpose.msra.mxu0 %v407
  %455 = vmatprep.subr.mxu0 0.0
  %456 = vmatpush1.xpose.msra.mxu0 %v410
  %457 = vmatprep.subr.mxu0 0.0
  %458 = vmatpush1.xpose.msra.mxu0 %v413
  %459 = vmatprep.subr.mxu0 0.0
  %460 = vmatpush1.xpose.msra.mxu0 %v416
  %461 = vmatprep.subr.mxu0 0.0
  %462 = vmatpush1.xpose.msra.mxu0 %v419
  %463 = vmatprep.subr.mxu0 0.0
  %464 = vmatpush1.xpose.msra.mxu0 %v422
  %465 = vmatprep.subr.mxu0 0.0
  %466 = vmatpush1.xpose.msra.mxu0 %v425
  %467 = vmatprep.subr.mxu0 0.0
  %468 = vmatpush1.xpose.msra.mxu0 %v428
  %469 = vmatprep.subr.mxu0 0.0
  %470 = vmatpush1.xpose.msra.mxu0 %v431
  %471 = vmatprep.subr.mxu0 0.0
  %472 = vmatpush1.xpose.msra.mxu0 %v433
  %473 = vmatprep.subr.mxu0 0.0
  %474 = vmatpush1.xpose.msra.mxu0 0.0
  %475 = vmatprep.subr.mxu0 0.0
  %476 = vmatpush1.xpose.msra.mxu0 0.0
  %477 = vmatprep.subr.mxu0 0.0
  %478 = vmatpush1.xpose.msra.mxu0 0.0
  %479 = vmatprep.subr.mxu0 0.0
  %480 = vmatpush1.xpose.msra.mxu0 0.0
  %481 = vmatprep.subr.mxu0 0.0
  %482 = vmatpush1.xpose.msra.mxu0 0.0
  %483 = vmatprep.subr.mxu0 0.0
  %484 = vmatpush1.xpose.msra.mxu0 0.0
  %485 = vmatprep.subr.mxu0 0.0
  %486 = vmatpush1.xpose.msra.mxu0 0.0
  %487 = vmatprep.subr.mxu0 0.0
  %488 = vmatpush1.xpose.msra.mxu0 0.0
  %489 = vmatprep.subr.mxu0 0.0
  %490 = vmatpush1.xpose.msra.mxu0 0.0
  %491 = vmatprep.subr.mxu0 0.0
  %492 = vmatpush1.xpose.msra.mxu0 0.0
  %493 = vmatprep.subr.mxu0 0.0
  %494 = vmatpush1.xpose.msra.mxu0 0.0
  %495 = vmatprep.subr.mxu0 0.0
  %496 = vmatpush1.xpose.msra.mxu0 0.0
  %497 = vmatprep.subr.mxu0 0.0
  %498 = vmatpush1.xpose.msra.mxu0 0.0
  %499 = vmatprep.mubr.f32.mxu0 0.0
  %500 = vmatmul.mubr.f32.gmra.mrb[0].mxu0 %v368
  %v501 = vpop.f32.mrb[0].mxu0
  %v502 = vadd.f32 0.0, %v501
  %v503 = vpop.f32.mrb[0].mxu0
  %v504 = vadd.f32 0.0, %v503
  %505 = vmatprep.mubr.f32.mxu0 0.0
  %506 = vmatmul.mubr.f32.gmra.mrb[0].mxu0 %v371
  %v507 = vpop.f32.mrb[0].mxu0
  %v508 = vadd.f32 0.0, %v507
  %v509 = vpop.f32.mrb[0].mxu0
  %v510 = vadd.f32 0.0, %v509
  %511 = vmatprep.mubr.f32.mxu0 0.0
  %512 = vmatmul.mubr.f32.gmra.mrb[0].mxu0 %v374
  %v513 = vpop.f32.mrb[0].mxu0
  %v514 = vadd.f32 0.0, %v513
  %v515 = vpop.f32.mrb[0].mxu0
  %v516 = vadd.f32 0.0, %v515
  %517 = vmatprep.mubr.f32.mxu0 0.0
  %518 = vmatmul.mubr.f32.gmra.mrb[0].mxu0 %v377
  %v519 = vpop.f32.mrb[0].mxu0
  %v520 = vadd.f32 0.0, %v519
  %v521 = vpop.f32.mrb[0].mxu0
  %v522 = vadd.f32 0.0, %v521
  %523 = vdwg.mxu0
  %vm524 = vcmp.gt.f32.partialorder %v33, 0.0
  %vm525 = vcmp.gt.f32.partialorder %v34, 0.0
  %vm526 = vcmp.gt.f32.partialorder %v35, 0.0
  %vm527 = vcmp.gt.f32.partialorder %v36, 0.0
  %vm528 = vcmp.gt.f32.partialorder %v37, 0.0
  %vm529 = vcmp.gt.f32.partialorder %v38, 0.0
  %vm530 = vcmp.gt.f32.partialorder %v39, 0.0
  %vm531 = vcmp.gt.f32.partialorder %v40, 0.0
  %v532 = vsel %vm524, %v502, -1e+30
  %v533 = vsel %vm525, %v504, -1e+30
  %v534 = vsel %vm526, %v508, -1e+30
  %v535 = vsel %vm527, %v510, -1e+30
  %v536 = vsel %vm528, %v514, -1e+30
  %v537 = vsel %vm529, %v516, -1e+30
  %v538 = vsel %vm530, %v520, -1e+30
  %v539 = vsel %vm531, %v522, -1e+30
  %v540 = vsel %vm264, %v533, -inf
  %v541 = vmax.f32 %v532, %v540
  %542 = vmax.xlane.f32.xlu0 %v541
  %v543 = vpop.xlane.xlu0 %542
  %v544 = vsel %vm264, %v535, -inf
  %v545 = vmax.f32 %v534, %v544
  %546 = vmax.xlane.f32.xlu0 %v545
  %v547 = vpop.xlane.xlu0 %546
  %v548 = vsel %vm264, %v537, -inf
  %v549 = vmax.f32 %v536, %v548
  %550 = vmax.xlane.f32.xlu0 %v549
  %v551 = vpop.xlane.xlu0 %550
  %v552 = vsel %vm264, %v539, -inf
  %v553 = vmax.f32 %v538, %v552
  %554 = vmax.xlane.f32.xlu0 %v553
  %v555 = vpop.xlane.xlu0 %554
  %v556 = vsub.f32 %v532, %v543
  %v557 = vsub.f32 %v533, %v543
  %v558 = vsub.f32 %v534, %v547
  %v559 = vsub.f32 %v535, %v547
  %v560 = vsub.f32 %v536, %v551
  %v561 = vsub.f32 %v537, %v551
  %v562 = vsub.f32 %v538, %v555
  %v563 = vsub.f32 %v539, %v555
  %v564 = vmul.f32 %v556, 1.442695
  %v565 = vpow.pop %v564
  %v566 = vmul.f32 %v557, 1.442695
  %v567 = vpow.pop %v566
  %v568 = vmul.f32 %v558, 1.442695
  %v569 = vpow.pop %v568
  %v570 = vmul.f32 %v559, 1.442695
  %v571 = vpow.pop %v570
  %v572 = vmul.f32 %v560, 1.442695
  %v573 = vpow.pop %v572
  %v574 = vmul.f32 %v561, 1.442695
  %v575 = vpow.pop %v574
  %v576 = vmul.f32 %v562, 1.442695
  %v577 = vpow.pop %v576
  %v578 = vmul.f32 %v563, 1.442695
  %v579 = vpow.pop %v578
  %v580 = vsel %vm264, %v567, 0.0
  %v581 = vadd.f32 %v565, %v580
  %582 = vadd.xlane.f32.xlu0 %v581
  %v583 = vpop.xlane.xlu0 %582
  %v584 = vsel %vm264, %v571, 0.0
  %v585 = vadd.f32 %v569, %v584
  %586 = vadd.xlane.f32.xlu0 %v585
  %v587 = vpop.xlane.xlu0 %586
  %v588 = vsel %vm264, %v575, 0.0
  %v589 = vadd.f32 %v573, %v588
  %590 = vadd.xlane.f32.xlu0 %v589
  %v591 = vpop.xlane.xlu0 %590
  %v592 = vsel %vm264, %v579, 0.0
  %v593 = vadd.f32 %v577, %v592
  %594 = vadd.xlane.f32.xlu0 %v593
  %v595 = vpop.xlane.xlu0 %594
  %v596 = vrcp.pop %v583
  %v597 = vmul.f32 %v565, %v596
  %v598 = vmul.f32 %v567, %v596
  %v599 = vrcp.pop %v587
  %v600 = vmul.f32 %v569, %v599
  %v601 = vmul.f32 %v571, %v599
  %v602 = vrcp.pop %v591
  %v603 = vmul.f32 %v573, %v602
  %v604 = vmul.f32 %v575, %v602
  %v605 = vrcp.pop %v595
  %v606 = vmul.f32 %v577, %v605
  %v607 = vmul.f32 %v579, %v605
  %v609 = vsel %vm264, %v598, 0
  %v612 = vsel %vm264, %v601, 0
  %v615 = vsel %vm264, %v604, 0
  %v618 = vsel %vm264, %v607, 0
  %v620 = vsel %vm277, %v32, 0
  %622 = vmatprep.subr.mxu0 0.0
  %623 = vmatpush1.msra.mxu0 %v14
  %624 = vmatprep.subr.mxu0 0.0
  %625 = vmatpush1.msra.mxu0 %v15
  %626 = vmatprep.subr.mxu0 0.0
  %627 = vmatpush1.msra.mxu0 %v16
  %628 = vmatprep.subr.mxu0 0.0
  %629 = vmatpush1.msra.mxu0 %v17
  %630 = vmatprep.subr.mxu0 0.0
  %631 = vmatpush1.msra.mxu0 %v18
  %632 = vmatprep.subr.mxu0 0.0
  %633 = vmatpush1.msra.mxu0 %v19
  %634 = vmatprep.subr.mxu0 0.0
  %635 = vmatpush1.msra.mxu0 %v20
  %636 = vmatprep.subr.mxu0 0.0
  %637 = vmatpush1.msra.mxu0 %v21
  %638 = vmatprep.subr.mxu0 0.0
  %639 = vmatpush1.msra.mxu0 %v22
  %640 = vmatprep.subr.mxu0 0.0
  %641 = vmatpush1.msra.mxu0 %v23
  %642 = vmatprep.subr.mxu0 0.0
  %643 = vmatpush1.msra.mxu0 %v24
  %644 = vmatprep.subr.mxu0 0.0
  %645 = vmatpush1.msra.mxu0 %v25
  %646 = vmatprep.subr.mxu0 0.0
  %647 = vmatpush1.msra.mxu0 %v26
  %648 = vmatprep.subr.mxu0 0.0
  %649 = vmatpush1.msra.mxu0 %v27
  %650 = vmatprep.subr.mxu0 0.0
  %651 = vmatpush1.msra.mxu0 %v28
  %652 = vmatprep.subr.mxu0 0.0
  %653 = vmatpush1.msra.mxu0 %v29
  %654 = vmatprep.subr.mxu0 0.0
  %655 = vmatpush1.msra.mxu0 %v30
  %656 = vmatprep.subr.mxu0 0.0
  %657 = vmatpush1.msra.mxu0 %v31
  %658 = vmatprep.subr.mxu0 0.0
  %659 = vmatpush1.msra.mxu0 %v620
  %660 = vmatprep.subr.mxu0 0.0
  %661 = vmatpush1.msra.mxu0 0.0
  %662 = vmatprep.subr.mxu0 0.0
  %663 = vmatpush1.msra.mxu0 0.0
  %664 = vmatprep.subr.mxu0 0.0
  %665 = vmatpush1.msra.mxu0 0.0
  %666 = vmatprep.subr.mxu0 0.0
  %667 = vmatpush1.msra.mxu0 0.0
  %668 = vmatprep.subr.mxu0 0.0
  %669 = vmatpush1.msra.mxu0 0.0
  %670 = vmatprep.subr.mxu0 0.0
  %671 = vmatpush1.msra.mxu0 0.0
  %672 = vmatprep.subr.mxu0 0.0
  %673 = vmatpush1.msra.mxu0 0.0
  %674 = vmatprep.subr.mxu0 0.0
  %675 = vmatpush1.msra.mxu0 0.0
  %676 = vmatprep.subr.mxu0 0.0
  %677 = vmatpush1.msra.mxu0 0.0
  %678 = vmatprep.subr.mxu0 0.0
  %679 = vmatpush1.msra.mxu0 0.0
  %680 = vmatprep.subr.mxu0 0.0
  %681 = vmatpush1.msra.mxu0 0.0
  %682 = vmatprep.subr.mxu0 0.0
  %683 = vmatpush1.msra.mxu0 0.0
  %684 = vmatprep.subr.mxu0 0.0
  %685 = vmatpush1.msra.mxu0 0.0
  %686 = vmatprep.mubr.f32.mxu0 %v609
  %687 = vmatmul.mubr.f32.gmra.mrb[0].mxu0 %v597
  %v688 = vpop.f32.mrb[0].mxu0
  %v689 = vadd.f32 0.0, %v688
  %v690 = vpop.f32.mrb[0].mxu0
  %691 = vmatprep.mubr.f32.mxu0 %v612
  %692 = vmatmul.mubr.f32.gmra.mrb[0].mxu0 %v600
  %v693 = vpop.f32.mrb[0].mxu0
  %v694 = vadd.f32 0.0, %v693
  %v695 = vpop.f32.mrb[0].mxu0
  %696 = vmatprep.mubr.f32.mxu0 %v615
  %697 = vmatmul.mubr.f32.gmra.mrb[0].mxu0 %v603
  %v698 = vpop.f32.mrb[0].mxu0
  %v699 = vadd.f32 0.0, %v698
  %v700 = vpop.f32.mrb[0].mxu0
  %701 = vmatprep.mubr.f32.mxu0 %v618
  %702 = vmatmul.mubr.f32.gmra.mrb[0].mxu0 %v606
  %v703 = vpop.f32.mrb[0].mxu0
  %v704 = vadd.f32 0.0, %v703
  %v705 = vpop.f32.mrb[0].mxu0
  %706 = vdwg.mxu0
  %707 = vst.msk [vmem:[%s3] sm:$0xff] %vm42, %v689
  %708 = vst.msk [vmem:[%s3 + $0x8] sm:$0xff] %vm42, %v694
  %709 = vst.msk [vmem:[%s3 + $0x10] sm:$0xff] %vm42, %v699
  %710 = vst.msk [vmem:[%s3 + $0x18] sm:$0xff] %vm42, %v704
  // Predicated region
  $region14: #{tpu_custom_call.1} parent=0 // pred_check
    _
  $region15: #{tpu_custom_call.1} parent=0 // pred_check_branch
    %712 = sbr.rel (0) target = $region17
  $region16: #{tpu_custom_call.1} parent=0 // pred_region
    _
  $region17: #{tpu_custom_call.1} parent=0 // pred_fallthru
    _
  // Predicated region
  $region18: #{tpu_custom_call.1} parent=0 // pred_check
    _
  $region19: #{tpu_custom_call.1} parent=0 // pred_check_branch
    %714 = sbr.rel (0) target = $region21
  $region20: #{tpu_custom_call.1} parent=0 // pred_region
    _
  $region21: #{tpu_custom_call.1} parent=0 // pred_fallthru
    _

</llo_original>
